<compile_context>
chip_gen: v7x
topology: tpu7x:2x2x1
jax: 0.10.0
libtpu: 0.0.40
codegen_flags: <defaults>
</compile_context>

<pallas_src>
import jax
import jax.numpy as jnp
from jax.experimental import pallas as pl
from jax.experimental.pallas import tpu as pltpu


def _round_up(x, m):
    return ((x + m - 1) // m) * m


# ---------------------------------------------------------------------------
# Segmentation kernel: one grid step = one batch item, all S heads.
#   lane 0: BCE-with-logits sum over all heads / pixels of this batch item
#   lane 1: sum of dice losses over heads (only if this item's mask has a 1)
# ---------------------------------------------------------------------------
def _seg_kernel(seg_ref, mask_ref, stats_ref):
    x = seg_ref[...][:, 0].astype(jnp.float32)    # (S, R, 128) logits
    y = mask_ref[...][0].astype(jnp.float32)      # (R, 128) mask in {0, 1}

    # Shared exponential for BCE and sigmoid (EUP saving).
    e = jnp.exp(-jnp.abs(x))                      # exp(-|x|)
    bce = jnp.maximum(x, 0.0) - x * y[None, :, :] + jnp.log1p(e)
    bce_sum = jnp.sum(bce)

    r = pl.reciprocal(1.0 + e, approx=True)
    p = jnp.where(x >= 0.0, r, e * r)             # sigmoid(x)

    smooth = 1e-5
    y_sum = jnp.sum(y * y)
    has_pos = jnp.max(y) == 1.0                   # lunamask[j].max() == 1

    dice_total = jnp.float32(0.0)
    S = x.shape[0]
    for s in range(S):                            # static, small
        ps = p[s]
        intersect = jnp.sum(ps * y)
        z_sum = jnp.sum(ps * ps)
        dice = 1.0 - (2.0 * intersect + smooth) / (z_sum + y_sum + smooth)
        dice_total = dice_total + dice
    dice_add = jnp.where(has_pos, dice_total, 0.0)

    lane = jax.lax.broadcasted_iota(jnp.int32, (1, 1, 128), 2)
    stats_ref[...] = (jnp.where(lane == 0, bce_sum, 0.0)
                      + jnp.where(lane == 1, dice_add, 0.0))


# ---------------------------------------------------------------------------
# Detection (positive anchors) kernel over (5, TN) lane-dense tiles.
# Masked-reduction statistics (one per lane of its own output row):
#   lane 0: P (#positives)              lane 5: #(pos & prob>=0.5)
#   lane 1: #(pos & p<0.9)              lane 6..8: smooth-l1 sums cols 1..3
#   lane 2: sum 4*log(p)*(1-p)^2 there  lane 9: smooth-l1 sum col 4
#   lane 3: #(pos & p>=0.9)
#   lane 4: sum log(p)*(1-p)^2 there
# ---------------------------------------------------------------------------
def _det_pos_kernel(out_ref, lab_ref, stats_ref):
    out = out_ref[...].astype(jnp.float32)    # (5, TN)
    lab = lab_ref[...].astype(jnp.float32)    # (5, TN)

    pos = lab[0:1, :] == 1.0                  # (1, TN)
    posf = pos.astype(jnp.float32)

    eps = 1e-8
    p = jnp.clip(jax.nn.sigmoid(out[0:1, :]), eps, 1.0 - eps)

    m1 = jnp.logical_and(pos, p < 0.9)
    m2 = jnp.logical_and(pos, p >= 0.9)

    t = jnp.log(p) * (1.0 - p) * (1.0 - p)

    P = jnp.sum(posf)
    c1 = jnp.sum(m1.astype(jnp.float32))
    s1 = jnp.sum(jnp.where(m1, 4.0 * t, 0.0))
    c2 = jnp.sum(m2.astype(jnp.float32))
    s2 = jnp.sum(jnp.where(m2, t, 0.0))
    pc = jnp.sum(jnp.where(jnp.logical_and(pos, p >= 0.5), 1.0, 0.0))

    # SmoothL1 (beta = 1) sums over positive anchors for columns 1..4.
    sl_sums = []
    for c in range(1, 5):
        d = out[c:c + 1, :] - lab[c:c + 1, :]
        ad = jnp.abs(d)
        sl = jnp.where(ad < 1.0, 0.5 * d * d, ad - 0.5)
        sl_sums.append(jnp.sum(sl * posf))
    oz, oh, ow, rg = sl_sums

    lane = jax.lax.broadcasted_iota(jnp.int32, (1, 1, 128), 2)
    vals = [P, c1, s1, c2, s2, pc, oz, oh, ow, rg]
    upd = jnp.zeros((1, 1, 128), jnp.float32)
    for idx, v in enumerate(vals):
        upd = jnp.where(lane == idx, v, upd)
    stats_ref[...] = upd


# ---------------------------------------------------------------------------
# Wrapper reproducing Loss.forward
# ---------------------------------------------------------------------------
def loss_forward(output, segout, labels, lunamask, *, pos_num=1, flag=0, train=True):
    B = labels.shape[0]

    # ---------------- segmentation loss ----------------
    if flag == 0:
        seg = jnp.stack([s[:, 0] for s in segout], axis=0).astype(jnp.float32)  # (S,B,H,W)
        mask = lunamask[:, 0].astype(jnp.float32)                                # (B,H,W)
        S, Bs, H, W = seg.shape
        HW = H * W
        HWpad = _round_up(HW, 128)
        seg_flat = seg.reshape(S, Bs, HW)
        mask_flat = mask.reshape(Bs, HW)
        if HWpad != HW:
            # -1e4 logits contribute exactly 0 to BCE and 0 to sigmoid/dice.
            seg_flat = jnp.pad(seg_flat, ((0, 0), (0, 0), (0, HWpad - HW)),
                               constant_values=-1e4)
            mask_flat = jnp.pad(mask_flat, ((0, 0), (0, HWpad - HW)))
        R = HWpad // 128
        seg_flat = seg_flat.reshape(S, Bs, R, 128)
        mask_flat = mask_flat.reshape(Bs, R, 128)

        seg_stats = pl.pallas_call(
            _seg_kernel,
            grid=(Bs,),
            in_specs=[pl.BlockSpec((S, 1, R, 128), lambda b: (0, b, 0, 0)),
                      pl.BlockSpec((1, R, 128), lambda b: (b, 0, 0))],
            out_specs=pl.BlockSpec((1, 1, 128), lambda b: (b, 0, 0)),
            out_shape=jax.ShapeDtypeStruct((Bs, 1, 128), jnp.float32),
            compiler_params=pltpu.CompilerParams(
                dimension_semantics=("parallel",)),
        )(seg_flat, mask_flat)
        seg_sum = seg_stats.sum(axis=(0, 1))          # (128,)
        seg_bce = seg_sum[0] / float(Bs * H * W)      # = sum_i mean-BCE_i
        seg_dice = seg_sum[1]
        seg_loss = 0.5 * seg_bce + 0.5 * seg_dice
    else:
        seg_loss = jnp.float32(0.0)

    # ---------------- detection losses ----------------
    out_flat = output.reshape(-1, 5).astype(jnp.float32)
    lab_flat = labels.reshape(-1, 5).astype(jnp.float32)
    N = out_flat.shape[0]

    # Large lane-dense tiles; pad once (after the single transpose) to the
    # final TN multiple.  Padded label column-0 is 0 -> neither pos nor neg.
    TN = max(128, min(8192, _round_up(N, 128)))
    Npad = _round_up(N, TN)
    out_t = out_flat.T   # (5, N)
    lab_t = lab_flat.T   # (5, N)
    if Npad != N:
        out_t = jnp.pad(out_t, ((0, 0), (0, Npad - N)))
        lab_t = jnp.pad(lab_t, ((0, 0), (0, Npad - N)))
    nb = Npad // TN

    pos_stats = pl.pallas_call(
        _det_pos_kernel,
        grid=(nb,),
        in_specs=[pl.BlockSpec((5, TN), lambda i: (0, i)),
                  pl.BlockSpec((5, TN), lambda i: (0, i))],
        out_specs=pl.BlockSpec((1, 1, 128), lambda i: (i, 0, 0)),
        out_shape=jax.ShapeDtypeStruct((nb, 1, 128), jnp.float32),
        compiler_params=pltpu.CompilerParams(
            dimension_semantics=("parallel",)),
    )(out_t, lab_t)
    pos_sum = pos_stats.sum(axis=(0, 1))              # (128,)
    P, c1, s1, c2, s2, pc, oz, oh, ow, rg = [pos_sum[k] for k in range(10)]

    # -------- hard-negative mining + negative focal term (plain jnp glue) ----
    eps = 1e-8
    neg_mask = lab_flat[:, 0] == -1.0
    cls_logits = out_flat[:, 0]

    if train:
        # TODO(synk): PyTorch uses num_hard=100 when there are no positives
        # (data-dependent); here num_hard = pos_num * 100 statically, which is
        # identical whenever pos_num == 1.
        num_hard = pos_num * 100
        K = min(num_hard * B, N)
        neg_scores = jnp.where(neg_mask, cls_logits, -jnp.inf)
        top_vals = jax.lax.top_k(neg_scores, K)[0]
        valid = jnp.isfinite(top_vals)                # mask filler when #neg < K
        p_neg = jnp.clip(jax.nn.sigmoid(top_vals), eps, 1.0 - eps)
    else:
        valid = neg_mask
        p_neg = jnp.clip(jax.nn.sigmoid(cls_logits), eps, 1.0 - eps)

    validf = valid.astype(jnp.float32)
    n_neg = jnp.sum(validf)
    neg_loss = (jnp.sum(jnp.where(valid, jnp.log(1.0 - p_neg) * p_neg * p_neg, 0.0))
                / jnp.maximum(n_neg, 1.0))
    neg_correct = jnp.sum(jnp.where(valid, (p_neg < 0.5).astype(jnp.float32), 0.0))
    neg_total = n_neg.astype(jnp.int32)

    # -------- focal / classify loss combination (matches _neg_loss) ----------
    pos_loss1 = jnp.where(c1 > 0, s1 / jnp.maximum(c1, 1.0), 0.0)
    pos_loss2 = jnp.where(c2 > 0, s2 / jnp.maximum(c2, 1.0), 0.0)
    pos_loss = pos_loss1 + pos_loss2
    classify = jnp.where(P > 0, -(0.25 * pos_loss + 0.75 * neg_loss), -neg_loss)

    denom = jnp.maximum(P, 1.0)
    off_z = jnp.where(P > 0, oz / denom, 0.0)
    off_h = jnp.where(P > 0, oh / denom, 0.0)
    off_w = jnp.where(P > 0, ow / denom, 0.0)
    regress = jnp.where(P > 0, rg / denom, 0.0)

    loss = classify + regress + off_z + off_h + off_w + seg_loss

    return [loss, classify, regress, off_z, off_h, off_w, seg_loss,
            pc.astype(jnp.int32), P.astype(jnp.int32),
            neg_correct.astype(jnp.int32), neg_total]


if __name__ == "__main__":
    key = jax.random.PRNGKey(0)
    k1, k2, k3 = jax.random.split(key, 3)

    # Detection part: labels / output of shape (B, D, H, W, 5)
    B, D, H, W, C = 2, 4, 8, 8, 5
    N = B * D * H * W  # 512 anchors

    output = jax.random.normal(k1, (B, D, H, W, C), jnp.float32)
    # Make a few positive logits large so both focal-loss branches are exercised.
    out_flat = output.reshape(N, C)
    out_flat = out_flat.at[:4, 0].set(4.0)
    output = out_flat.reshape(B, D, H, W, C)

    # labels[...,0]: 12 positives (=1), 20 ignored (=0), rest negatives (=-1)
    lab0 = jnp.concatenate([jnp.ones(12), jnp.zeros(20), -jnp.ones(N - 32)])
    lab_rest = jax.random.normal(k2, (N, 4), jnp.float32)
    labels = jnp.concatenate([lab0[:, None], lab_rest], axis=1).reshape(B, D, H, W, C)

    # Segmentation part: 2 segout heads of shape (B, 1, Hs, Ws), mask (B, 1, Hs, Ws)
    Hs, Ws, S = 16, 16, 2
    segout = [jax.random.normal(jax.random.fold_in(k3, i), (B, 1, Hs, Ws), jnp.float32)
              for i in range(S)]
    lunamask = jnp.zeros((B, 1, Hs, Ws), jnp.float32)
    lunamask = lunamask.at[0, 0, 4:8, 4:8].set(1.0)  # batch 0 has lesion pixels, batch 1 none

    res = loss_forward(output, segout, labels, lunamask,
                       pos_num=1, flag=0, train=True)
    jax.block_until_ready(res)
    print("KERNEL_OK")
</pallas_src>

<mosaic_0001>
module attributes {stable_mosaic.version = 11 : i64} {
  func.func @_seg_kernel(%arg0: i32, %arg1: memref<2x1x2x128xf32, #tpu.memory_space<vmem>>, %arg2: memref<1x2x128xf32, #tpu.memory_space<vmem>>, %arg3: memref<1x1x128xf32, #tpu.memory_space<vmem>>) attributes {dimension_semantics = [#tpu.dimension_semantics<parallel>], iteration_bounds = array<i64: 2>, scalar_prefetch = 0 : i64, scratch_operands = 0 : i64, tpu.core_type = #tpu.core_type<tc>, window_params = [{transform_indices = @transform_0, window_bounds = array<i64: 2, 1, 2, 128>}, {transform_indices = @transform_1, window_bounds = array<i64: 1, 2, 128>}, {transform_indices = @transform_2, window_bounds = array<i64: 1, 1, 128>}]} {
    %c0 = arith.constant 0 : index
    %c0_0 = arith.constant 0 : index
    %c0_1 = arith.constant 0 : index
    %c0_2 = arith.constant 0 : index
    %0 = vector.load %arg1[%c0, %c0_0, %c0_1, %c0_2] : memref<2x1x2x128xf32, #tpu.memory_space<vmem>>, vector<2x1x2x128xf32>
    %1 = vector.shape_cast %0 : vector<2x1x2x128xf32> to vector<2x2x128xf32>
    %c0_3 = arith.constant 0 : index
    %c0_4 = arith.constant 0 : index
    %c0_5 = arith.constant 0 : index
    %2 = vector.load %arg2[%c0_3, %c0_4, %c0_5] : memref<1x2x128xf32, #tpu.memory_space<vmem>>, vector<1x2x128xf32>
    %3 = vector.shape_cast %2 : vector<1x2x128xf32> to vector<2x128xf32>
    %4 = math.absf %1 : vector<2x2x128xf32>
    %cst = arith.constant 0.000000e+00 : f32
    %5 = vector.broadcast %cst : f32 to vector<2x2x128xf32>
    %6 = arith.subf %5, %4 : vector<2x2x128xf32>
    %7 = math.exp %6 : vector<2x2x128xf32>
    %cst_6 = arith.constant 0.000000e+00 : f32
    %8 = vector.broadcast %cst_6 : f32 to vector<2x2x128xf32>
    %9 = arith.maximumf %1, %8 : vector<2x2x128xf32>
    %10 = vector.shape_cast %3 : vector<2x128xf32> to vector<1x2x128xf32>
    %11 = vector.broadcast %10 : vector<1x2x128xf32> to vector<2x2x128xf32>
    %12 = arith.mulf %1, %11 : vector<2x2x128xf32>
    %13 = arith.subf %9, %12 : vector<2x2x128xf32>
    %14 = math.log1p %7 : vector<2x2x128xf32>
    %15 = arith.addf %13, %14 : vector<2x2x128xf32>
    %16 = vector.shape_cast %15 : vector<2x2x128xf32> to vector<1x2x2x128xf32>
    %cst_7 = arith.constant dense<0.000000e+00> : vector<1xf32>
    %17 = vector.multi_reduction <add>, %16, %cst_7 [1, 2, 3] : vector<1x2x2x128xf32> to vector<1xf32>
    %18 = vector.shape_cast %17 : vector<1xf32> to vector<1x1x1x1xf32>
    %19 = vector.extract %18[0, 0, 0, 0] : f32 from vector<1x1x1x1xf32>
    %cst_8 = arith.constant 1.000000e+00 : f32
    %20 = vector.broadcast %cst_8 : f32 to vector<2x2x128xf32>
    %21 = arith.addf %20, %7 : vector<2x2x128xf32>
    %22 = tpu.reciprocal %21 {approx = true} : vector<2x2x128xf32> -> vector<2x2x128xf32>
    %cst_9 = arith.constant 0.000000e+00 : f32
    %23 = vector.broadcast %cst_9 : f32 to vector<2x2x128xf32>
    %24 = arith.cmpf oge, %1, %23 : vector<2x2x128xf32>
    %25 = arith.mulf %7, %22 : vector<2x2x128xf32>
    %26 = arith.select %24, %22, %25 : vector<2x2x128xi1>, vector<2x2x128xf32>
    %27 = arith.mulf %3, %3 : vector<2x128xf32>
    %28 = vector.shape_cast %27 : vector<2x128xf32> to vector<1x2x128xf32>
    %cst_10 = arith.constant dense<0.000000e+00> : vector<1xf32>
    %29 = vector.multi_reduction <add>, %28, %cst_10 [1, 2] : vector<1x2x128xf32> to vector<1xf32>
    %30 = vector.shape_cast %29 : vector<1xf32> to vector<1x1x1xf32>
    %31 = vector.extract %30[0, 0, 0] : f32 from vector<1x1x1xf32>
    %32 = vector.shape_cast %3 : vector<2x128xf32> to vector<1x2x128xf32>
    %cst_11 = arith.constant dense<0xFF800000> : vector<1xf32>
    %33 = vector.multi_reduction <maximumf>, %32, %cst_11 [1, 2] : vector<1x2x128xf32> to vector<1xf32>
    %34 = vector.shape_cast %33 : vector<1xf32> to vector<1x1x1xf32>
    %35 = vector.extract %34[0, 0, 0] : f32 from vector<1x1x1xf32>
    %cst_12 = arith.constant 1.000000e+00 : f32
    %36 = arith.cmpf oeq, %35, %cst_12 : f32
    %37 = vector.extract_strided_slice %26 {offsets = [0, 0, 0], sizes = [1, 2, 128], strides = [1, 1, 1]} : vector<2x2x128xf32> to vector<1x2x128xf32>
    %38 = vector.shape_cast %37 : vector<1x2x128xf32> to vector<2x128xf32>
    %39 = arith.mulf %38, %3 : vector<2x128xf32>
    %40 = vector.shape_cast %39 : vector<2x128xf32> to vector<1x2x128xf32>
    %cst_13 = arith.constant dense<0.000000e+00> : vector<1xf32>
    %41 = vector.multi_reduction <add>, %40, %cst_13 [1, 2] : vector<1x2x128xf32> to vector<1xf32>
    %42 = vector.shape_cast %41 : vector<1xf32> to vector<1x1x1xf32>
    %43 = vector.extract %42[0, 0, 0] : f32 from vector<1x1x1xf32>
    %44 = arith.mulf %38, %38 : vector<2x128xf32>
    %45 = vector.shape_cast %44 : vector<2x128xf32> to vector<1x2x128xf32>
    %cst_14 = arith.constant dense<0.000000e+00> : vector<1xf32>
    %46 = vector.multi_reduction <add>, %45, %cst_14 [1, 2] : vector<1x2x128xf32> to vector<1xf32>
    %47 = vector.shape_cast %46 : vector<1xf32> to vector<1x1x1xf32>
    %48 = vector.extract %47[0, 0, 0] : f32 from vector<1x1x1xf32>
    %cst_15 = arith.constant 2.000000e+00 : f32
    %49 = arith.mulf %cst_15, %43 : f32
    %cst_16 = arith.constant 9.99999974E-6 : f32
    %50 = arith.addf %49, %cst_16 : f32
    %51 = arith.addf %48, %31 : f32
    %cst_17 = arith.constant 9.99999974E-6 : f32
    %52 = arith.addf %51, %cst_17 : f32
    %53 = arith.divf %50, %52 : f32
    %cst_18 = arith.constant 1.000000e+00 : f32
    %54 = arith.subf %cst_18, %53 : f32
    %cst_19 = arith.constant 0.000000e+00 : f32
    %55 = arith.addf %cst_19, %54 : f32
    %56 = vector.extract_strided_slice %26 {offsets = [1, 0, 0], sizes = [1, 2, 128], strides = [1, 1, 1]} : vector<2x2x128xf32> to vector<1x2x128xf32>
    %57 = vector.shape_cast %56 : vector<1x2x128xf32> to vector<2x128xf32>
    %58 = arith.mulf %57, %3 : vector<2x128xf32>
    %59 = vector.shape_cast %58 : vector<2x128xf32> to vector<1x2x128xf32>
    %cst_20 = arith.constant dense<0.000000e+00> : vector<1xf32>
    %60 = vector.multi_reduction <add>, %59, %cst_20 [1, 2] : vector<1x2x128xf32> to vector<1xf32>
    %61 = vector.shape_cast %60 : vector<1xf32> to vector<1x1x1xf32>
    %62 = vector.extract %61[0, 0, 0] : f32 from vector<1x1x1xf32>
    %63 = arith.mulf %57, %57 : vector<2x128xf32>
    %64 = vector.shape_cast %63 : vector<2x128xf32> to vector<1x2x128xf32>
    %cst_21 = arith.constant dense<0.000000e+00> : vector<1xf32>
    %65 = vector.multi_reduction <add>, %64, %cst_21 [1, 2] : vector<1x2x128xf32> to vector<1xf32>
    %66 = vector.shape_cast %65 : vector<1xf32> to vector<1x1x1xf32>
    %67 = vector.extract %66[0, 0, 0] : f32 from vector<1x1x1xf32>
    %cst_22 = arith.constant 2.000000e+00 : f32
    %68 = arith.mulf %cst_22, %62 : f32
    %cst_23 = arith.constant 9.99999974E-6 : f32
    %69 = arith.addf %68, %cst_23 : f32
    %70 = arith.addf %67, %31 : f32
    %cst_24 = arith.constant 9.99999974E-6 : f32
    %71 = arith.addf %70, %cst_24 : f32
    %72 = arith.divf %69, %71 : f32
    %cst_25 = arith.constant 1.000000e+00 : f32
    %73 = arith.subf %cst_25, %72 : f32
    %74 = arith.addf %55, %73 : f32
    %cst_26 = arith.constant 0.000000e+00 : f32
    %75 = arith.select %36, %74, %cst_26 : f32
    %76 = tpu.iota {dimensions = array<i32: 2>} : vector<1x1x128xi32>
    %c0_i32 = arith.constant 0 : i32
    %77 = vector.broadcast %c0_i32 : i32 to vector<1x1x128xi32>
    %78 = arith.cmpi eq, %76, %77 : vector<1x1x128xi32>
    %cst_27 = arith.constant 0.000000e+00 : f32
    %79 = vector.broadcast %19 : f32 to vector<1x1x128xf32>
    %80 = vector.broadcast %cst_27 : f32 to vector<1x1x128xf32>
    %81 = arith.select %78, %79, %80 : vector<1x1x128xi1>, vector<1x1x128xf32>
    %c1_i32 = arith.constant 1 : i32
    %82 = vector.broadcast %c1_i32 : i32 to vector<1x1x128xi32>
    %83 = arith.cmpi eq, %76, %82 : vector<1x1x128xi32>
    %cst_28 = arith.constant 0.000000e+00 : f32
    %84 = vector.broadcast %75 : f32 to vector<1x1x128xf32>
    %85 = vector.broadcast %cst_28 : f32 to vector<1x1x128xf32>
    %86 = arith.select %83, %84, %85 : vector<1x1x128xi1>, vector<1x1x128xf32>
    %87 = arith.addf %81, %86 : vector<1x1x128xf32>
    %c0_29 = arith.constant 0 : index
    %c0_30 = arith.constant 0 : index
    %c0_31 = arith.constant 0 : index
    %88 = vector.load %arg3[%c0_29, %c0_30, %c0_31] : memref<1x1x128xf32, #tpu.memory_space<vmem>>, vector<1x1x128xf32>
    tpu.vector_store %arg3[%c0_29, %c0_30, %c0_31], %87 {strides = array<i32>} : memref<1x1x128xf32, #tpu.memory_space<vmem>>, vector<1x1x128xf32>,
    return
  }
  func.func @transform_0(%arg0: i32) -> (i32, i32, i32, i32) {
    %c0_i32 = arith.constant 0 : i32
    %c0_i32_0 = arith.constant 0 : i32
    %c0_i32_1 = arith.constant 0 : i32
    %c0_i32_2 = arith.constant 0 : i32
    return %c0_i32, %arg0, %c0_i32_0, %c0_i32_1 : i32, i32, i32, i32
  }
  func.func @transform_1(%arg0: i32) -> (i32, i32, i32) {
    %c0_i32 = arith.constant 0 : i32
    %c0_i32_0 = arith.constant 0 : i32
    %c0_i32_1 = arith.constant 0 : i32
    return %arg0, %c0_i32, %c0_i32_0 : i32, i32, i32
  }
  func.func @transform_2(%arg0: i32) -> (i32, i32, i32) {
    %c0_i32 = arith.constant 0 : i32
    %c0_i32_0 = arith.constant 0 : i32
    %c0_i32_1 = arith.constant 0 : i32
    return %arg0, %c0_i32, %c0_i32_0 : i32, i32, i32
  }
}

</mosaic_0001>

<llo_original>
// kernel: tpu_custom_call.1
$region0: #{tpu_custom_call.1}
  #allocation0 [shape = 'u32[]', space=smem, size = 0x4, offset = 0x4, fixed_abs, tag = 'smem constant byte address 0x4 - core index']
  #allocation1 [shape = 'u32[144,128]{1,0:T(1,128)}', space=vmem, size = 0x12000, scoped, tag = 'internal scratch']
  %s0 = inlined_call_operand.hbm [shape: f32[2,2,2,128], index: 0, kind: input, shape index: {}]
  %s1 = inlined_call_operand.hbm [shape: f32[2,2,128], index: 1, kind: input, shape index: {}]
  %s2 = inlined_call_operand.hbm [shape: f32[2,1,128], index: 2, kind: output, shape index: {}]
  %s3 = sld [smem:[#allocation0]]
  $region49: #{tpu_custom_call.1} parent=0
    _
  %s5 = ssub.s32 1, %s3
  %s6 = scalar_select 0, %s5, %s3
  $region1: #{tpu_custom_call.1} parent=0
    #allocation2 [shape = 'u8[4096]{0}', space=vmem, size = 0x1000, scoped, tag = 'input window, operand 0']
    #allocation3 [shape = 's32[2]{0}', space=sflag, size = 0x8, scoped, tag = 'scoped memory for tpu_custom_call.1']
    #allocation4 [shape = 's32[2]{0}', space=sflag, size = 0x8, scoped, tag = 'scoped memory for tpu_custom_call.1']
    #allocation5 [shape = 'u8[2048]{0}', space=vmem, size = 0x800, scoped, tag = 'input window, operand 1']
    #allocation6 [shape = 's32[2]{0}', space=sflag, size = 0x8, scoped, tag = 'scoped memory for tpu_custom_call.1']
    #allocation7 [shape = 'u8[1024]{0}', space=vmem, size = 0x400, scoped, tag = 'output window, operand 0']
    %7 = vsyncpa [#allocation3], 0
    %s8 = scalar_lea.sflag [#allocation3], 1
    %9 = vsyncpa %s8, 0
    %10 = vsyncpa [#allocation6], 0
    %s11 = scalar_lea.sflag [#allocation6], 1
    %12 = vsyncpa %s11, 0
    %13 = vsyncpa [#allocation4], 0
    %s14 = scalar_lea.sflag [#allocation4], 1
    %15 = vsyncpa %s14, 0
    loop: start=0, step=1, limit=4
    $region2: #{tpu_custom_call.1} parent=1 // loop_pre_header
      _
    $region3: #{tpu_custom_call.1} parent=1 // loop_header
      %s17 = sphi 0, %s21
      %p18 = scmp.ge.s32.totalorder %s17, 4
      %s27 = sphi 0, %s29
      %s30 = sphi 0, %s27
      %s31 = sphi 0, %s30
      %s47 = sphi 0, %s31
      %s53 = sphi 0, %s55
      %s56 = sphi 0, %s53
      %s57 = sphi 0, %s56
      %s73 = sphi 0, %s57
      %s79 = sphi 0, %s81
      %s82 = sphi 0, %s79
      %s83 = sphi 0, %s82
      %s99 = sphi 0, %s83
    $region4: #{tpu_custom_call.1} parent=1 // loop_header_branch
      %20 = sbr.rel (%p18) target = $region8
    $region5: #{tpu_custom_call.1} parent=1 // loop_body
      %s22 = ssub.s32 %s17, 1
      %s23 = ssub.s32 %s17, 2
      %s24 = sadd.s32 %s17, 1
      %s25 = ssub.s32 %s17, %s24
      %p26 = scmp.eq.s32.totalorder %s25, 0
      %s28 = sadd.s32 %s27, 1
      %s29 = scalar_select %p26, %s27, %s28
      %p32 = pneg %p26
      %p33 = scmp.eq.s32.totalorder %s17, 1
      %p34 = por %p32, %p33
      %p35 = scmp.ne.s32.totalorder %s27, %s30
      %p36 = scmp.eq.s32.totalorder %s17, 0
      %p37 = por %p35, %p36
      %p38 = scmp.ne.s32.totalorder %s27, %s30
      %p39 = scmp.eq.s32.totalorder %s22, 1
      %p40 = por %p38, %p39
      %p41 = scmp.ne.s32.totalorder %s30, %s31
      %p42 = scmp.eq.s32.totalorder %s22, 0
      %p43 = por %p41, %p42
      %p44 = scmp.ne.s32.totalorder %s30, %s31
      %p45 = scmp.eq.s32.totalorder %s23, 1
      %p46 = por %p44, %p45
      %p48 = scmp.ne.s32.totalorder %s31, %s47
      %p49 = scmp.eq.s32.totalorder %s23, 0
      %p50 = por %p48, %p49
      %s51 = ssub.s32 %s17, %s24
      %p52 = scmp.eq.s32.totalorder %s51, 0
      %s54 = sadd.s32 %s53, 1
      %s55 = scalar_select %p52, %s53, %s54
      %p58 = pneg %p52
      %p59 = scmp.eq.s32.totalorder %s17, 1
      %p60 = por %p58, %p59
      %p61 = scmp.ne.s32.totalorder %s53, %s56
      %p62 = scmp.eq.s32.totalorder %s17, 0
      %p63 = por %p61, %p62
      %p64 = scmp.ne.s32.totalorder %s53, %s56
      %p65 = scmp.eq.s32.totalorder %s22, 1
      %p66 = por %p64, %p65
      %p67 = scmp.ne.s32.totalorder %s56, %s57
      %p68 = scmp.eq.s32.totalorder %s22, 0
      %p69 = por %p67, %p68
      %p70 = scmp.ne.s32.totalorder %s56, %s57
      %p71 = scmp.eq.s32.totalorder %s23, 1
      %p72 = por %p70, %p71
      %p74 = scmp.ne.s32.totalorder %s57, %s73
      %p75 = scmp.eq.s32.totalorder %s23, 0
      %p76 = por %p74, %p75
      %s77 = ssub.s32 %s17, %s24
      %p78 = scmp.eq.s32.totalorder %s77, 0
      %s80 = sadd.s32 %s79, 1
      %s81 = scalar_select %p78, %s79, %s80
      %p84 = pneg %p78
      %p85 = scmp.eq.s32.totalorder %s17, 1
      %p86 = por %p84, %p85
      %p87 = scmp.ne.s32.totalorder %s79, %s82
      %p88 = scmp.eq.s32.totalorder %s17, 0
      %p89 = por %p87, %p88
      %p90 = scmp.ne.s32.totalorder %s79, %s82
      %p91 = scmp.eq.s32.totalorder %s22, 1
      %p92 = por %p90, %p91
      %p93 = scmp.ne.s32.totalorder %s82, %s83
      %p94 = scmp.eq.s32.totalorder %s22, 0
      %p95 = por %p93, %p94
      %p96 = scmp.ne.s32.totalorder %s82, %s83
      %p97 = scmp.eq.s32.totalorder %s23, 1
      %p98 = por %p96, %p97
      %p100 = scmp.ne.s32.totalorder %s83, %s99
      %p101 = scmp.eq.s32.totalorder %s23, 0
      %p102 = por %p100, %p101
      %p103 = scmp.le.s32.totalorder 1, %s17
      %p104 = scmp.lt.s32.totalorder %s17, 3
      %p105 = pnand %p103, %p104
      %p106 = pneg %p105
      // Predicated region
      $region9: #{tpu_custom_call.1} parent=5 // pred_check
        _
      $region10: #{tpu_custom_call.1} parent=5 // pred_check_branch
        %108 = sbr.rel (%p105) target = $region12
      $region11: #{tpu_custom_call.1} parent=5 // pred_region
        %s109 = ssub.s32 %s17, 1
      $region12: #{tpu_custom_call.1} parent=5 // pred_fallthru
        _
      %p110 = scmp.lt.s32.totalorder %s17, 2
      // Predicated region
      $region13: #{tpu_custom_call.1} parent=5 // pred_check
        %p111 = pneg %p110
      $region14: #{tpu_custom_call.1} parent=5 // pred_check_branch
        %113 = sbr.rel (%p111) target = $region16
      $region15: #{tpu_custom_call.1} parent=5 // pred_region
        // Predicated region
        $region17: #{tpu_custom_call.1} parent=15 // pred_check
          %p114 = pneg %p37
        $region18: #{tpu_custom_call.1} parent=15 // pred_check_branch
          %116 = sbr.rel (%p114) target = $region20
        $region19: #{tpu_custom_call.1} parent=15 // pred_region
          %s117 = sand.u32 %s27, 1
          %s118 = scalar_lea.sflag [#allocation3], %s117
          %s119 = sand.u32 %s27, 1
          %s120 = smul.addr %s119, 4
          %s121 = scalar_lea.vmem [#allocation2], %s120
          %s123 = ssub.s32 64, 64
          %124 = vsyncadd %s118, %s123
          %s125 = smul.addr %s17, 32
          %s126 = scalar_lea.hbm %s0, %s125
          %s127 = sshll.u32 %s121, 4
          %s128 = int_to_ptr.vmem [resolvable:$true] %s127
          %133 = dma.hbm_to_vmem [thread:$0]  %s126, 64, %s128, %s118, 64, 32, 2
        $region20: #{tpu_custom_call.1} parent=15 // pred_fallthru
          _
        // Predicated region
        $region21: #{tpu_custom_call.1} parent=15 // pred_check
          %p134 = pneg %p63
        $region22: #{tpu_custom_call.1} parent=15 // pred_check_branch
          %136 = sbr.rel (%p134) target = $region24
        $region23: #{tpu_custom_call.1} parent=15 // pred_region
          %s137 = sand.u32 %s53, 1
          %s138 = scalar_lea.sflag [#allocation6], %s137
          %s139 = sand.u32 %s53, 1
          %s140 = smul.addr %s139, 2
          %s141 = scalar_lea.vmem [#allocation5], %s140
          %s143 = ssub.s32 32, 32
          %144 = vsyncadd %s138, %s143
          %s145 = smul.addr %s17, 32
          %s146 = scalar_lea.hbm %s1, %s145
          %s148 = sshll.u32 %s141, 4
          %s149 = int_to_ptr.vmem [resolvable:$true] %s148
          %151 = dma.hbm_to_vmem [thread:$0]  %s146, 32, %s149, %s138
        $region24: #{tpu_custom_call.1} parent=15 // pred_fallthru
          _
      $region16: #{tpu_custom_call.1} parent=5 // pred_fallthru
        _
      %p152 = scmp.le.s32.totalorder 1, %s17
      %p153 = scmp.lt.s32.totalorder %s17, 3
      %p154 = pnand %p152, %p153
      %p155 = pneg %p154
      // Predicated region
      $region25: #{tpu_custom_call.1} parent=5 // pred_check
        _
      $region26: #{tpu_custom_call.1} parent=5 // pred_check_branch
        %157 = sbr.rel (%p154) target = $region28
      $region27: #{tpu_custom_call.1} parent=5 // pred_region
        %s158 = ssub.s32 %s17, 1
        %s159 = sand.u32 %s30, 1
        %s160 = scalar_lea.sflag [#allocation3], %s159
        %s161 = sand.u32 %s30, 1
        %s162 = smul.addr %s161, 4
        %s163 = scalar_lea.vmem [#allocation2], %s162
        // Predicated region
        $region29: #{tpu_custom_call.1} parent=27 // pred_check
          %p164 = pneg %p43
        $region30: #{tpu_custom_call.1} parent=27 // pred_check_branch
          %166 = sbr.rel (%p164) target = $region32
        $region31: #{tpu_custom_call.1} parent=27 // pred_region
          %167 = dma.done %s160, 64
        $region32: #{tpu_custom_call.1} parent=27 // pred_fallthru
          _
        %s168 = sand.u32 %s56, 1
        %s169 = scalar_lea.sflag [#allocation6], %s168
        %s170 = sand.u32 %s56, 1
        %s171 = smul.addr %s170, 2
        %s172 = scalar_lea.vmem [#allocation5], %s171
        // Predicated region
        $region33: #{tpu_custom_call.1} parent=27 // pred_check
          %p173 = pneg %p69
        $region34: #{tpu_custom_call.1} parent=27 // pred_check_branch
          %175 = sbr.rel (%p173) target = $region36
        $region35: #{tpu_custom_call.1} parent=27 // pred_region
          %176 = dma.done %s169, 32
        $region36: #{tpu_custom_call.1} parent=27 // pred_fallthru
          _
        %s177 = sand.u32 %s30, 1
        %s178 = scalar_lea.sflag [#allocation3], %s177
        %s179 = sand.u32 %s30, 1
        %s180 = smul.addr %s179, 4
        %s181 = scalar_lea.vmem [#allocation2], %s180
        %p182 = pneg %p43
        %p183 = pneg %p40
        %s184 = sand.u32 %s56, 1
        %s185 = scalar_lea.sflag [#allocation6], %s184
        %s186 = sand.u32 %s56, 1
        %s187 = smul.addr %s186, 2
        %s188 = scalar_lea.vmem [#allocation5], %s187
        %p189 = pneg %p69
        %p190 = pneg %p66
        %p191 = pneg %p95
        %p192 = pneg %p92
        %s193 = sand.u32 %s82, 1
        %s194 = scalar_lea.sflag [#allocation4], %s193
        %s195 = sand.u32 %s82, 1
        %s196 = scalar_lea.vmem [#allocation7], %s195
        %v197 = vld [vmem:[%s163] sm:$0x3]
        %v198 = vld [vmem:[%s163 + $0x2] sm:$0x3]
        %v199 = vld [vmem:[%s172] sm:$0x3]
        %v200 = vand.u32 2147483647, %v197
        %v201 = vand.u32 2147483647, %v198
        %v202 = vsub.f32 0.0, %v200
        %v203 = vsub.f32 0.0, %v201
        %v204 = vmul.f32 %v202, 1.442695
        %v205 = vpow.pop %v204
        %v206 = vmul.f32 %v203, 1.442695
        %v207 = vpow.pop %v206
        %v208 = vmax.f32 %v197, 0.0
        %v209 = vmax.f32 %v198, 0.0
        %v210 = vmul.f32 %v197, %v199
        %v211 = vmul.f32 %v198, %v199
        %v212 = vsub.f32 %v208, %v210
        %v213 = vsub.f32 %v209, %v211
        %v214 = vadd.f32 %v205, 1.0
        %v215 = vlog2.pop %v214
        %v216 = vmul.f32 %v215, 0.6931472
        %v217 = vmul.f32 -0.5, %v205
        %v218 = vadd.f32 %v217, 1.0
        %v219 = vmul.f32 %v218, %v205
        %v220 = vand.u32 2147483647, %v205
        %vm221 = vcmp.lt.f32.partialorder %v220, 0.0004427343
        %v222 = vsel %vm221, %v219, %v216
        %v223 = vadd.f32 %v207, 1.0
        %v224 = vlog2.pop %v223
        %v225 = vmul.f32 %v224, 0.6931472
        %v226 = vmul.f32 -0.5, %v207
        %v227 = vadd.f32 %v226, 1.0
        %v228 = vmul.f32 %v227, %v207
        %v229 = vand.u32 2147483647, %v207
        %vm230 = vcmp.lt.f32.partialorder %v229, 0.0004427343
        %v231 = vsel %vm230, %v228, %v225
        %v232 = vadd.f32 %v212, %v222
        %v233 = vadd.f32 %v213, %v231
        %vm234 = vcmask 1041408
        %v235 = vsel %vm234, %v232, 0.0
        %v236 = vsel %vm234, %v233, 0.0
        %v237 = vadd.f32 %v235, %v236
        %238 = vadd.xlane.f32.xlu0 %v237
        %v239 = vpop.xlane.xlu0 %238
        %v240 = vrot.slane %v239, 4
        %v241 = vadd.f32 %v239, %v240
        %v242 = vrot.slane %v241, 2
        %v243 = vadd.f32 %v241, %v242
        %v244 = vrot.slane %v243, 1
        %v245 = vadd.f32 %v243, %v244
        %s246 = vtos %v245
        %v247 = vadd.f32 %v205, 1.0
        %v248 = vadd.f32 %v207, 1.0
        %v249 = vrcp.pop %v247
        %v250 = vrcp.pop %v248
        %vm251 = vcmp.ge.f32.partialorder %v197, 0.0
        %vm252 = vcmp.ge.f32.partialorder %v198, 0.0
        %v253 = vmul.f32 %v205, %v249
        %v254 = vmul.f32 %v207, %v250
        %v255 = vsel %vm251, %v249, %v253
        %v256 = vsel %vm252, %v250, %v254
        %v257 = vmul.f32 %v199, %v199
        %v258 = vsel %vm234, %v257, 0.0
        %259 = vadd.xlane.f32.xlu0 %v258
        %v260 = vpop.xlane.xlu0 %259
        %v261 = vrot.slane %v260, 4
        %v262 = vadd.f32 %v260, %v261
        %v263 = vrot.slane %v262, 2
        %v264 = vadd.f32 %v262, %v263
        %v265 = vrot.slane %v264, 1
        %v266 = vadd.f32 %v264, %v265
        %s267 = vtos %v266
        %v268 = vsel %vm234, %v199, -inf
        %269 = vmax.xlane.f32.xlu0 %v268
        %v270 = vpop.xlane.xlu0 %269
        %v271 = vrot.slane %v270, 4
        %v272 = vmax.f32 %v270, %v271
        %v273 = vrot.slane %v272, 2
        %v274 = vmax.f32 %v272, %v273
        %v275 = vrot.slane %v274, 1
        %v276 = vmax.f32 %v274, %v275
        %s277 = vtos %v276
        %p278 = scmp.eq.f32.partialorder %s277, 1.0
        %v279 = vmul.f32 %v255, %v199
        %v280 = vsel %vm234, %v279, 0.0
        %281 = vadd.xlane.f32.xlu0 %v280
        %v282 = vpop.xlane.xlu0 %281
        %v283 = vrot.slane %v282, 4
        %v284 = vadd.f32 %v282, %v283
        %v285 = vrot.slane %v284, 2
        %v286 = vadd.f32 %v284, %v285
        %v287 = vrot.slane %v286, 1
        %v288 = vadd.f32 %v286, %v287
        %s289 = vtos %v288
        %v290 = vmul.f32 %v255, %v255
        %v291 = vsel %vm234, %v290, 0.0
        %292 = vadd.xlane.f32.xlu0 %v291
        %v293 = vpop.xlane.xlu0 %292
        %v294 = vrot.slane %v293, 4
        %v295 = vadd.f32 %v293, %v294
        %v296 = vrot.slane %v295, 2
        %v297 = vadd.f32 %v295, %v296
        %v298 = vrot.slane %v297, 1
        %v299 = vadd.f32 %v297, %v298
        %s300 = vtos %v299
        %s301 = smul.f32 %s289, 2.0
        %s302 = sadd.f32 %s301, 1e-05
        %s303 = sadd.f32 %s300, %s267
        %s304 = sadd.f32 %s303, 1e-05
        %v305 = vstv %s304
        %v306 = vrcp.pop %v305
        %s307 = vtos %v306
        %s308 = smul.f32 %s302, %s307
        %s309 = ssub.f32 1.0, %s308
        %s310 = sadd.f32 %s309, 0.0
        %v311 = vmul.f32 %v256, %v199
        %v312 = vsel %vm234, %v311, 0.0
        %313 = vadd.xlane.f32.xlu0 %v312
        %v314 = vpop.xlane.xlu0 %313
        %v315 = vrot.slane %v314, 4
        %v316 = vadd.f32 %v314, %v315
        %v317 = vrot.slane %v316, 2
        %v318 = vadd.f32 %v316, %v317
        %v319 = vrot.slane %v318, 1
        %v320 = vadd.f32 %v318, %v319
        %s321 = vtos %v320
        %v322 = vmul.f32 %v256, %v256
        %v323 = vsel %vm234, %v322, 0.0
        %324 = vadd.xlane.f32.xlu0 %v323
        %v325 = vpop.xlane.xlu0 %324
        %v326 = vrot.slane %v325, 4
        %v327 = vadd.f32 %v325, %v326
        %v328 = vrot.slane %v327, 2
        %v329 = vadd.f32 %v327, %v328
        %v330 = vrot.slane %v329, 1
        %v331 = vadd.f32 %v329, %v330
        %s332 = vtos %v331
        %s333 = smul.f32 %s321, 2.0
        %s334 = sadd.f32 %s333, 1e-05
        %s335 = sadd.f32 %s332, %s267
        %s336 = sadd.f32 %s335, 1e-05
        %v337 = vstv %s336
        %v338 = vrcp.pop %v337
        %s339 = vtos %v338
        %s340 = smul.f32 %s334, %s339
        %s341 = ssub.f32 1.0, %s340
        %s342 = sadd.f32 %s310, %s341
        %s343 = scalar_select %p278, %s342, 0.0
        %v344 = vlaneseq
        %v345 = vand.u32 %v344, 127
        %vm346 = vcmp.eq.s32.totalorder %v345, 0
        %v347 = vstv %s246
        %v348 = vsel %vm346, %v347, 0.0
        %vm349 = vcmp.eq.s32.totalorder %v345, 1
        %v350 = vstv %s343
        %v351 = vsel %vm349, %v350, 0.0
        %v352 = vadd.f32 %v348, %v351
        %353 = vst [vmem:[%s196] sm:$0x1] %v352
        %s354 = sand.u32 %s82, 1
        %s355 = scalar_lea.sflag [#allocation4], %s354
        %s356 = sand.u32 %s82, 1
        %s357 = scalar_lea.vmem [#allocation7], %s356
        // Predicated region
        $region37: #{tpu_custom_call.1} parent=27 // pred_check
          %p358 = pneg %p92
        $region38: #{tpu_custom_call.1} parent=27 // pred_check_branch
          %360 = sbr.rel (%p358) target = $region40
        $region39: #{tpu_custom_call.1} parent=27 // pred_region
          %s362 = ssub.s32 16, 16
          %363 = vsyncadd %s355, %s362
          %s364 = smul.addr %s22, 16
          %s365 = scalar_lea.hbm %s2, %s364
          %s367 = sshll.u32 %s357, 4
          %s368 = int_to_ptr.vmem [resolvable:$true] %s367
          %370 = dma.vmem_to_hbm [thread:$0]  %s368, 16, %s365, %s355
        $region40: #{tpu_custom_call.1} parent=27 // pred_fallthru
          _
      $region28: #{tpu_custom_call.1} parent=5 // pred_fallthru
        _
      %p371 = scmp.le.s32.totalorder 2, %s17
      // Predicated region
      $region41: #{tpu_custom_call.1} parent=5 // pred_check
        %p372 = pneg %p371
      $region42: #{tpu_custom_call.1} parent=5 // pred_check_branch
        %374 = sbr.rel (%p372) target = $region44
      $region43: #{tpu_custom_call.1} parent=5 // pred_region
        %s375 = ssub.s32 %s17, 2
        // Predicated region
        $region45: #{tpu_custom_call.1} parent=43 // pred_check
          %p376 = pneg %p98
        $region46: #{tpu_custom_call.1} parent=43 // pred_check_branch
          %378 = sbr.rel (%p376) target = $region48
        $region47: #{tpu_custom_call.1} parent=43 // pred_region
          %s379 = sand.u32 %s83, 1
          %s380 = scalar_lea.sflag [#allocation4], %s379
          %s381 = sand.u32 %s83, 1
          %s382 = scalar_lea.vmem [#allocation7], %s381
          %383 = dma.done %s380, 16
        $region48: #{tpu_custom_call.1} parent=43 // pred_fallthru
          _
      $region44: #{tpu_custom_call.1} parent=5 // pred_fallthru
        _
    $region6: #{tpu_custom_call.1} parent=1 // loop_footer
      %s21 = sadd.s32 1, %s17
    $region7: #{tpu_custom_call.1} parent=1 // loop_footer_branch
      %16 = sbr.rel target = $region3
    $region8: #{tpu_custom_call.1} parent=1 // loop_exit
      _
    %384 = vsyncpa [#allocation3], 1
    %s385 = scalar_lea.sflag [#allocation3], 1
    %386 = vsyncpa %s385, 1
    %387 = vsyncpa [#allocation6], 1
    %s388 = scalar_lea.sflag [#allocation6], 1
    %389 = vsyncpa %s388, 1
    %390 = vsyncpa [#allocation4], 1
    %s391 = scalar_lea.sflag [#allocation4], 1
    %392 = vsyncpa %s391, 1

</llo_original>
